<compile_context>
chip_gen: v7x
topology: tpu7x:2x2x1
jax: 0.10.0
libtpu: 0.0.40
codegen_flags: <defaults>
</compile_context>

<pallas_src>
import functools

import jax
import jax.numpy as jnp
from jax.experimental import pallas as pl
from jax.experimental.pallas import tpu as pltpu


def _label_smoothing_kernel(pred_ref, tgt_ref, out_ref, *, n_rows, classes,
                            smoothing, tile_n):
    # pred_ref: (tile_n, C) native dtype, tgt_ref: (tile_n, 1) i32,
    # out_ref:  (1, 1, 128) f32 partial-sum block for this grid step.
    i = pl.program_id(0)

    x = pred_ref[...].astype(jnp.float32)                        # (tile_n, C)
    tgt = tgt_ref[...]                                           # (tile_n, 1) i32

    # Row-validity mask for the (possibly) ragged last block; zero padded rows
    # up front so garbage/NaN never enters the softmax chain.
    row = jax.lax.broadcasted_iota(jnp.int32, (tile_n, 1), 0) + i * tile_n
    valid = row < n_rows                                         # (tile_n, 1)
    x = jnp.where(valid, x, 0.0)

    confidence = 1.0 - smoothing
    off_value = smoothing / (classes - 1)

    # Numerically stable log-softmax pieces: logp_j = x_j - m - lse.
    m = jnp.max(x, axis=-1, keepdims=True)                       # (tile_n, 1)
    se = jnp.sum(jnp.exp(x - m), axis=-1, keepdims=True)         # (tile_n, 1)
    lse = jnp.log(se)                                            # (tile_n, 1)

    # Fused smoothed weighted sum. w_j = confidence at the target column and
    # off_value elsewhere, so sum_j w_j == 1 and
    #   per_row = -(sum_j w_j * logp_j) = (m + lse) - sum_j w_j * x_j.
    col = jax.lax.broadcasted_iota(jnp.int32, (1, classes), 1)   # (1, C)
    w = jnp.where(col == tgt, confidence, off_value)             # (tile_n, C)
    wx = jnp.sum(w * x, axis=-1, keepdims=True)                  # (tile_n, 1)

    per_row = (m + lse) - wx                                     # (tile_n, 1)
    per_row = jnp.where(valid, per_row, 0.0)

    out_ref[...] = jnp.full(out_ref.shape, jnp.sum(per_row), dtype=jnp.float32)


def _vmem_capacity_bytes():
    """Physical VMEM of the attached TPU generation (fallback: 128 MiB)."""
    try:
        info = pltpu.get_tpu_info()
        cap = getattr(info, "vmem_capacity_bytes", None)
        if cap:
            return int(cap)
    except Exception:
        pass
    return 128 << 20


def label_smoothing_loss(pred, target, *, classes, smoothing=0.1, tile_n=None):
    """Pallas implementation of LabelSmoothingLoss.forward (dim=-1).

    pred:   (N, C) float32 / bfloat16 logits (streamed in native dtype).
    target: (N,)   integer class ids.
    """
    n, c = pred.shape
    assert c == classes, f"pred last dim {c} must equal classes {classes}"
    tgt2 = target.astype(jnp.int32).reshape(n, 1)

    itemsize = jnp.dtype(pred.dtype).itemsize
    sublane = {4: 8, 2: 16, 1: 32}.get(itemsize, 8)      # packed-sublane multiple
    n_rounded = ((n + sublane - 1) // sublane) * sublane

    # Generation-aware scoped-VMEM cap: leave 16 MiB headroom below physical
    # (v7x: 64 -> 48 MiB; v5e/v6e: 128 -> 112 MiB).
    vmem_cap = max(32 << 20, _vmem_capacity_bytes() - (16 << 20))

    # VMEM cost per row of tile: 2x double-buffered native-dtype pred block,
    # ~4 (tile_n, C) f32 in-kernel temporaries (upcast / exp / weights / product),
    # plus the tiny target block.
    per_row_bytes = c * (2 * itemsize + 4 * 4) + 2 * 4 + 16
    tile_from_vmem = max(sublane,
                         ((vmem_cap - (4 << 20)) // per_row_bytes // sublane) * sublane)

    if tile_n is None:
        # Target a multi-MiB pred block so each grid step's DMA amortizes the
        # ~0.35 us per-step overhead and reaches HBM roofline.
        target_block_bytes = 8 << 20
        tile_n = max(sublane, target_block_bytes // max(1, c * itemsize))
    # Shrink the tile (never inflate the VMEM cap) when the budget is exceeded.
    tile_n = min(int(tile_n), tile_from_vmem, n_rounded)
    tile_n = int(max(sublane, (tile_n // sublane) * sublane))

    num_blocks = pl.cdiv(n, tile_n)

    vmem_needed = per_row_bytes * tile_n + (4 << 20)
    vmem_limit = int(min(vmem_cap, max(vmem_needed, 32 << 20)))

    partials = pl.pallas_call(
        functools.partial(
            _label_smoothing_kernel,
            n_rows=n, classes=classes, smoothing=float(smoothing), tile_n=tile_n,
        ),
        out_shape=jax.ShapeDtypeStruct((num_blocks, 1, 128), jnp.float32),
        grid_spec=pltpu.PrefetchScalarGridSpec(
            num_scalar_prefetch=0,
            grid=(num_blocks,),
            in_specs=[
                pl.BlockSpec((tile_n, c), lambda i: (i, 0)),
                pl.BlockSpec((tile_n, 1), lambda i: (i, 0)),
            ],
            out_specs=pl.BlockSpec((1, 1, 128), lambda i: (i, 0, 0)),
        ),
        compiler_params=pltpu.CompilerParams(
            dimension_semantics=("parallel",),
            vmem_limit_bytes=vmem_limit,
        ),
    )(pred, tgt2)

    # Tiny final reduction outside the kernel; divide by the true N.
    return jnp.sum(partials[:, 0, 0]) / jnp.float32(n)


def _reference_loss(pred, target, *, classes, smoothing=0.1):
    """Pure-JAX reference mirroring the PyTorch module exactly."""
    logp = jax.nn.log_softmax(pred.astype(jnp.float32), axis=-1)
    confidence = 1.0 - smoothing
    true_dist = jnp.full_like(logp, smoothing / (classes - 1))
    true_dist = true_dist.at[jnp.arange(pred.shape[0]), target].set(confidence)
    return jnp.mean(jnp.sum(-true_dist * logp, axis=-1))


if __name__ == "__main__":
    CLASSES = 160
    BATCH = 20          # deliberately NOT a multiple of tile_n to exercise masking
    SMOOTHING = 0.1
    TILE_N = 8          # small explicit tile so the demo exercises a multi-block grid

    key = jax.random.PRNGKey(0)
    k_pred, k_tgt = jax.random.split(key)
    pred = jax.random.normal(k_pred, (BATCH, CLASSES), dtype=jnp.float32)
    target = jax.random.randint(k_tgt, (BATCH,), 0, CLASSES, dtype=jnp.int32)

    # f32 path (explicit small tile -> 3 blocks + ragged last block).
    loss = label_smoothing_loss(pred, target, classes=CLASSES,
                                smoothing=SMOOTHING, tile_n=TILE_N)
    loss = jax.block_until_ready(loss)
    ref = _reference_loss(pred, target, classes=CLASSES, smoothing=SMOOTHING)
    assert jnp.allclose(loss, ref, atol=1e-4, rtol=1e-4), (loss, ref)

    # f32 path with auto tile sizing (single block at this small N).
    loss_auto = label_smoothing_loss(pred, target, classes=CLASSES,
                                     smoothing=SMOOTHING)
    loss_auto = jax.block_until_ready(loss_auto)
    assert jnp.allclose(loss_auto, ref, atol=1e-4, rtol=1e-4), (loss_auto, ref)

    # bf16-in-HBM path (native dtype streamed, upcast in-kernel, 16-row sublane tile).
    pred_bf16 = pred.astype(jnp.bfloat16)
    loss_bf = label_smoothing_loss(pred_bf16, target, classes=CLASSES,
                                   smoothing=SMOOTHING, tile_n=TILE_N)
    loss_bf = jax.block_until_ready(loss_bf)
    ref_bf = _reference_loss(pred_bf16, target, classes=CLASSES, smoothing=SMOOTHING)
    assert jnp.allclose(loss_bf, ref_bf, atol=1e-3, rtol=1e-3), (loss_bf, ref_bf)

    print("KERNEL_OK")
</pallas_src>

<mosaic_0001>
module attributes {stable_mosaic.version = 11 : i64} {
  func.func @_label_smoothing_kernel(%arg0: i32, %arg1: memref<8x160xf32, #tpu.memory_space<vmem>>, %arg2: memref<8x1xi32, #tpu.memory_space<vmem>>, %arg3: memref<1x1x128xf32, #tpu.memory_space<vmem>>) attributes {dimension_semantics = [#tpu.dimension_semantics<parallel>], iteration_bounds = array<i64: 3>, scalar_prefetch = 0 : i64, scratch_operands = 0 : i64, tpu.core_type = #tpu.core_type<tc>, window_params = [{transform_indices = @transform_0, window_bounds = array<i64: 8, 160>}, {transform_indices = @transform_1, window_bounds = array<i64: 8, 1>}, {transform_indices = @transform_2, window_bounds = array<i64: 1, 1, 128>}]} {
    %c0 = arith.constant 0 : index
    %c0_0 = arith.constant 0 : index
    %0 = vector.load %arg1[%c0, %c0_0] : memref<8x160xf32, #tpu.memory_space<vmem>>, vector<8x160xf32>
    %c0_1 = arith.constant 0 : index
    %c0_2 = arith.constant 0 : index
    %1 = vector.load %arg2[%c0_1, %c0_2] : memref<8x1xi32, #tpu.memory_space<vmem>>, vector<8x1xi32>
    %2 = tpu.iota {dimensions = array<i32: 0>} : vector<8x1xi32>
    %c8_i32 = arith.constant 8 : i32
    %3 = arith.muli %arg0, %c8_i32 : i32
    %4 = vector.broadcast %3 : i32 to vector<8x1xi32>
    %5 = arith.addi %2, %4 : vector<8x1xi32>
    %c20_i32 = arith.constant 20 : i32
    %6 = vector.broadcast %c20_i32 : i32 to vector<8x1xi32>
    %7 = arith.cmpi slt, %5, %6 : vector<8x1xi32>
    %cst = arith.constant 0.000000e+00 : f32
    %8 = vector.shape_cast %7 : vector<8x1xi1> to vector<8x1xi1>
    %9 = vector.broadcast %8 : vector<8x1xi1> to vector<8x160xi1>
    %10 = vector.broadcast %cst : f32 to vector<8x160xf32>
    %11 = arith.select %9, %0, %10 : vector<8x160xi1>, vector<8x160xf32>
    %cst_3 = arith.constant dense<0xFF800000> : vector<8xf32>
    %12 = vector.multi_reduction <maximumf>, %11, %cst_3 [1] : vector<8x160xf32> to vector<8xf32>
    %13 = vector.shape_cast %12 : vector<8xf32> to vector<8x1xf32>
    %14 = vector.broadcast %13 : vector<8x1xf32> to vector<8x160xf32>
    %15 = arith.subf %11, %14 : vector<8x160xf32>
    %16 = math.exp %15 : vector<8x160xf32>
    %cst_4 = arith.constant dense<0.000000e+00> : vector<8xf32>
    %17 = vector.multi_reduction <add>, %16, %cst_4 [1] : vector<8x160xf32> to vector<8xf32>
    %18 = vector.shape_cast %17 : vector<8xf32> to vector<8x1xf32>
    %19 = math.log %18 : vector<8x1xf32>
    %20 = tpu.iota {dimensions = array<i32: 1>} : vector<1x160xi32>
    %21 = vector.broadcast %20 : vector<1x160xi32> to vector<8x160xi32>
    %22 = vector.broadcast %1 : vector<8x1xi32> to vector<8x160xi32>
    %23 = arith.cmpi eq, %21, %22 : vector<8x160xi32>
    %cst_5 = arith.constant 0.899999976 : f32
    %cst_6 = arith.constant 6.28930808E-4 : f32
    %24 = vector.broadcast %cst_5 : f32 to vector<8x160xf32>
    %25 = vector.broadcast %cst_6 : f32 to vector<8x160xf32>
    %26 = arith.select %23, %24, %25 : vector<8x160xi1>, vector<8x160xf32>
    %27 = arith.mulf %26, %11 : vector<8x160xf32>
    %cst_7 = arith.constant dense<0.000000e+00> : vector<8xf32>
    %28 = vector.multi_reduction <add>, %27, %cst_7 [1] : vector<8x160xf32> to vector<8xf32>
    %29 = vector.shape_cast %28 : vector<8xf32> to vector<8x1xf32>
    %30 = arith.addf %13, %19 : vector<8x1xf32>
    %31 = arith.subf %30, %29 : vector<8x1xf32>
    %cst_8 = arith.constant 0.000000e+00 : f32
    %32 = vector.broadcast %cst_8 : f32 to vector<8x1xf32>
    %33 = arith.select %7, %31, %32 : vector<8x1xi1>, vector<8x1xf32>
    %34 = vector.shape_cast %33 : vector<8x1xf32> to vector<1x8x1xf32>
    %cst_9 = arith.constant dense<0.000000e+00> : vector<1xf32>
    %35 = vector.multi_reduction <add>, %34, %cst_9 [1, 2] : vector<1x8x1xf32> to vector<1xf32>
    %36 = vector.shape_cast %35 : vector<1xf32> to vector<1x1x1xf32>
    %37 = vector.extract %36[0, 0, 0] : f32 from vector<1x1x1xf32>
    %38 = vector.broadcast %37 : f32 to vector<1x1x128xf32>
    %c0_10 = arith.constant 0 : index
    %c0_11 = arith.constant 0 : index
    %c0_12 = arith.constant 0 : index
    %39 = vector.load %arg3[%c0_10, %c0_11, %c0_12] : memref<1x1x128xf32, #tpu.memory_space<vmem>>, vector<1x1x128xf32>
    tpu.vector_store %arg3[%c0_10, %c0_11, %c0_12], %38 {strides = array<i32>} : memref<1x1x128xf32, #tpu.memory_space<vmem>>, vector<1x1x128xf32>,
    return
  }
  func.func @transform_0(%arg0: i32) -> (i32, i32) {
    %c0_i32 = arith.constant 0 : i32
    %c0_i32_0 = arith.constant 0 : i32
    return %arg0, %c0_i32 : i32, i32
  }
  func.func @transform_1(%arg0: i32) -> (i32, i32) {
    %c0_i32 = arith.constant 0 : i32
    %c0_i32_0 = arith.constant 0 : i32
    return %arg0, %c0_i32 : i32, i32
  }
  func.func @transform_2(%arg0: i32) -> (i32, i32, i32) {
    %c0_i32 = arith.constant 0 : i32
    %c0_i32_0 = arith.constant 0 : i32
    %c0_i32_1 = arith.constant 0 : i32
    return %arg0, %c0_i32, %c0_i32_0 : i32, i32, i32
  }
}

</mosaic_0001>

<llo_original>
// kernel: tpu_custom_call.1
$region0: #{tpu_custom_call.1}
  #allocation0 [shape = 'u32[]', space=smem, size = 0x4, offset = 0x4, fixed_abs, tag = 'smem constant byte address 0x4 - core index']
  #allocation1 [shape = 'u32[144,128]{1,0:T(1,128)}', space=vmem, size = 0x12000, scoped, tag = 'internal scratch']
  %s0 = inlined_call_operand.hbm [shape: f32[20,160], index: 0, kind: input, shape index: {}]
  %s1 = inlined_call_operand.vmem [shape: s32[20,1], index: 1, kind: input, shape index: {}]
  %s2 = inlined_call_operand.hbm [shape: f32[3,1,128], index: 2, kind: output, shape index: {}]
  %s3 = sld [smem:[#allocation0]]
  $region45: #{tpu_custom_call.1} parent=0
    _
  %s5 = ssub.s32 1, %s3
  %s6 = scalar_select 0, %s5, %s3
  $region1: #{tpu_custom_call.1} parent=0
    #allocation2 [shape = 'u8[16384]{0}', space=vmem, size = 0x4000, scoped, tag = 'input window, operand 0']
    #allocation3 [shape = 's32[2]{0}', space=sflag, size = 0x8, scoped, tag = 'scoped memory for tpu_custom_call.1']
    #allocation4 [shape = 's32[2]{0}', space=sflag, size = 0x8, scoped, tag = 'scoped memory for tpu_custom_call.1']
    #allocation5 [shape = 'u8[1024]{0}', space=vmem, size = 0x400, scoped, tag = 'output window, operand 0']
    %7 = vsyncpa [#allocation3], 0
    %s8 = scalar_lea.sflag [#allocation3], 1
    %9 = vsyncpa %s8, 0
    %10 = vsyncpa [#allocation4], 0
    %s11 = scalar_lea.sflag [#allocation4], 1
    %12 = vsyncpa %s11, 0
    loop: start=0, step=1, limit=5
    $region2: #{tpu_custom_call.1} parent=1 // loop_pre_header
      _
    $region3: #{tpu_custom_call.1} parent=1 // loop_header
      %s14 = sphi 0, %s18
      %p15 = scmp.ge.s32.totalorder %s14, 5
      %s24 = sphi 0, %s26
      %s27 = sphi 0, %s24
      %s28 = sphi 0, %s27
      %s44 = sphi 0, %s28
      %s50 = sphi 0, %s52
      %s53 = sphi 0, %s50
      %s54 = sphi 0, %s53
      %s70 = sphi 0, %s54
      %s76 = sphi 0, %s78
      %s79 = sphi 0, %s76
      %s80 = sphi 0, %s79
      %s96 = sphi 0, %s80
    $region4: #{tpu_custom_call.1} parent=1 // loop_header_branch
      %17 = sbr.rel (%p15) target = $region8
    $region5: #{tpu_custom_call.1} parent=1 // loop_body
      %s19 = ssub.s32 %s14, 1
      %s20 = ssub.s32 %s14, 2
      %s21 = sadd.s32 %s14, 1
      %s22 = ssub.s32 %s14, %s21
      %p23 = scmp.eq.s32.totalorder %s22, 0
      %s25 = sadd.s32 %s24, 1
      %s26 = scalar_select %p23, %s24, %s25
      %p29 = pneg %p23
      %p30 = scmp.eq.s32.totalorder %s14, 2
      %p31 = por %p29, %p30
      %p32 = scmp.ne.s32.totalorder %s24, %s27
      %p33 = scmp.eq.s32.totalorder %s14, 0
      %p34 = por %p32, %p33
      %p35 = scmp.ne.s32.totalorder %s24, %s27
      %p36 = scmp.eq.s32.totalorder %s19, 2
      %p37 = por %p35, %p36
      %p38 = scmp.ne.s32.totalorder %s27, %s28
      %p39 = scmp.eq.s32.totalorder %s19, 0
      %p40 = por %p38, %p39
      %p41 = scmp.ne.s32.totalorder %s27, %s28
      %p42 = scmp.eq.s32.totalorder %s20, 2
      %p43 = por %p41, %p42
      %p45 = scmp.ne.s32.totalorder %s28, %s44
      %p46 = scmp.eq.s32.totalorder %s20, 0
      %p47 = por %p45, %p46
      %s48 = ssub.s32 %s14, %s21
      %p49 = scmp.eq.s32.totalorder %s48, 0
      %s51 = sadd.s32 %s50, 1
      %s52 = scalar_select %p49, %s50, %s51
      %p55 = pneg %p49
      %p56 = scmp.eq.s32.totalorder %s14, 2
      %p57 = por %p55, %p56
      %p58 = scmp.ne.s32.totalorder %s50, %s53
      %p59 = scmp.eq.s32.totalorder %s14, 0
      %p60 = por %p58, %p59
      %p61 = scmp.ne.s32.totalorder %s50, %s53
      %p62 = scmp.eq.s32.totalorder %s19, 2
      %p63 = por %p61, %p62
      %p64 = scmp.ne.s32.totalorder %s53, %s54
      %p65 = scmp.eq.s32.totalorder %s19, 0
      %p66 = por %p64, %p65
      %p67 = scmp.ne.s32.totalorder %s53, %s54
      %p68 = scmp.eq.s32.totalorder %s20, 2
      %p69 = por %p67, %p68
      %p71 = scmp.ne.s32.totalorder %s54, %s70
      %p72 = scmp.eq.s32.totalorder %s20, 0
      %p73 = por %p71, %p72
      %s74 = ssub.s32 %s14, %s21
      %p75 = scmp.eq.s32.totalorder %s74, 0
      %s77 = sadd.s32 %s76, 1
      %s78 = scalar_select %p75, %s76, %s77
      %p81 = pneg %p75
      %p82 = scmp.eq.s32.totalorder %s14, 2
      %p83 = por %p81, %p82
      %p84 = scmp.ne.s32.totalorder %s76, %s79
      %p85 = scmp.eq.s32.totalorder %s14, 0
      %p86 = por %p84, %p85
      %p87 = scmp.ne.s32.totalorder %s76, %s79
      %p88 = scmp.eq.s32.totalorder %s19, 2
      %p89 = por %p87, %p88
      %p90 = scmp.ne.s32.totalorder %s79, %s80
      %p91 = scmp.eq.s32.totalorder %s19, 0
      %p92 = por %p90, %p91
      %p93 = scmp.ne.s32.totalorder %s79, %s80
      %p94 = scmp.eq.s32.totalorder %s20, 2
      %p95 = por %p93, %p94
      %p97 = scmp.ne.s32.totalorder %s80, %s96
      %p98 = scmp.eq.s32.totalorder %s20, 0
      %p99 = por %p97, %p98
      %p100 = scmp.le.s32.totalorder 1, %s14
      %p101 = scmp.lt.s32.totalorder %s14, 4
      %p102 = pnand %p100, %p101
      %p103 = pneg %p102
      // Predicated region
      $region9: #{tpu_custom_call.1} parent=5 // pred_check
        _
      $region10: #{tpu_custom_call.1} parent=5 // pred_check_branch
        %105 = sbr.rel (%p102) target = $region12
      $region11: #{tpu_custom_call.1} parent=5 // pred_region
        %s106 = ssub.s32 %s14, 1
      $region12: #{tpu_custom_call.1} parent=5 // pred_fallthru
        _
      %p107 = scmp.lt.s32.totalorder %s14, 3
      // Predicated region
      $region13: #{tpu_custom_call.1} parent=5 // pred_check
        %p108 = pneg %p107
      $region14: #{tpu_custom_call.1} parent=5 // pred_check_branch
        %110 = sbr.rel (%p108) target = $region16
      $region15: #{tpu_custom_call.1} parent=5 // pred_region
        // Predicated region
        $region17: #{tpu_custom_call.1} parent=15 // pred_check
          %p111 = pneg %p34
        $region18: #{tpu_custom_call.1} parent=15 // pred_check_branch
          %113 = sbr.rel (%p111) target = $region20
        $region19: #{tpu_custom_call.1} parent=15 // pred_region
          %s114 = sand.u32 %s24, 1
          %s115 = scalar_lea.sflag [#allocation3], %s114
          %s116 = sand.u32 %s24, 1
          %s117 = smul.addr %s116, 16
          %s118 = scalar_lea.vmem [#allocation2], %s117
          %s120 = ssub.s32 256, 256
          %121 = vsyncadd %s115, %s120
          %s122 = smul.addr %s14, 2
          %s123 = smul.addr %s122, 128
          %s124 = scalar_lea.hbm %s0, %s123
          %s126 = sshll.u32 %s118, 4
          %s127 = int_to_ptr.vmem [resolvable:$true] %s126
          %129 = dma.hbm_to_vmem [thread:$0]  %s124, 256, %s127, %s115
        $region20: #{tpu_custom_call.1} parent=15 // pred_fallthru
          _
        // Predicated region
        $region21: #{tpu_custom_call.1} parent=15 // pred_check
          %p130 = pneg %p60
        $region22: #{tpu_custom_call.1} parent=15 // pred_check_branch
          %132 = sbr.rel (%p130) target = $region24
        $region23: #{tpu_custom_call.1} parent=15 // pred_region
          %p133 = scmp.lt.s32.totalorder %s14, 2
          %s134 = scalar_select %p133, %s14, 2
          %s135 = smul.addr %s134, 8
          %s136 = scalar_lea.vmem %s1, %s135
        $region24: #{tpu_custom_call.1} parent=15 // pred_fallthru
          _
      $region16: #{tpu_custom_call.1} parent=5 // pred_fallthru
        _
      %p137 = scmp.le.s32.totalorder 1, %s14
      %p138 = scmp.lt.s32.totalorder %s14, 4
      %p139 = pnand %p137, %p138
      %p140 = pneg %p139
      // Predicated region
      $region25: #{tpu_custom_call.1} parent=5 // pred_check
        _
      $region26: #{tpu_custom_call.1} parent=5 // pred_check_branch
        %142 = sbr.rel (%p139) target = $region28
      $region27: #{tpu_custom_call.1} parent=5 // pred_region
        %s143 = ssub.s32 %s14, 1
        %s144 = sand.u32 %s27, 1
        %s145 = scalar_lea.sflag [#allocation3], %s144
        %s146 = sand.u32 %s27, 1
        %s147 = smul.addr %s146, 16
        %s148 = scalar_lea.vmem [#allocation2], %s147
        // Predicated region
        $region29: #{tpu_custom_call.1} parent=27 // pred_check
          %p149 = pneg %p40
        $region30: #{tpu_custom_call.1} parent=27 // pred_check_branch
          %151 = sbr.rel (%p149) target = $region32
        $region31: #{tpu_custom_call.1} parent=27 // pred_region
          %152 = dma.done %s145, 256
        $region32: #{tpu_custom_call.1} parent=27 // pred_fallthru
          _
        %s153 = sand.u32 %s27, 1
        %s154 = scalar_lea.sflag [#allocation3], %s153
        %s155 = sand.u32 %s27, 1
        %s156 = smul.addr %s155, 16
        %s157 = scalar_lea.vmem [#allocation2], %s156
        %p158 = pneg %p40
        %p159 = pneg %p37
        %p160 = scmp.lt.s32.totalorder %s19, 2
        %s161 = scalar_select %p160, %s19, 2
        %s162 = smul.addr %s161, 8
        %s163 = scalar_lea.vmem %s1, %s162
        %p164 = pneg %p66
        %p165 = pneg %p63
        %p166 = pneg %p92
        %p167 = pneg %p89
        %s168 = sand.u32 %s79, 1
        %s169 = scalar_lea.sflag [#allocation4], %s168
        %s170 = sand.u32 %s79, 1
        %s171 = scalar_lea.vmem [#allocation5], %s170
        %p172 = scmp.lt.s32.totalorder %s19, 2
        %s173 = scalar_select %p172, %s19, 2
        %s174 = smul.addr %s173, 8
        %s175 = scalar_lea.vmem %s1, %s174
        %v176 = vld [vmem:[%s148] sm:$0xff]
        %v177 = vld [vmem:[%s148 + $0x8] sm:$0xff]
        %v178 = vld [vmem:[%s175] sm:$0xff]
        %v179 = vlaneseq
        %v180 = vshrl.u32 %v179, 7
        %s181 = smul.u32 %s19, 8
        %v182 = vstv %s181
        %v183 = vadd.s32 %v180, %v182
        %vm184 = vcmp.lt.s32.totalorder %v183, 20
        %v185 = vsel %vm184, 1, 0
        %vm186 = vcmp.eq.s32.totalorder %v185, 1
        %v187 = vsel %vm186, %v176, 0.0
        %v188 = vsel %vm186, %v177, 0.0
        %vm189 = vcmask 261120
        %v190 = vsel %vm189, %v188, -inf
        %v191 = vmax.f32 %v187, %v190
        %192 = vmax.xlane.f32.xlu0 %v191
        %v193 = vpop.xlane.xlu0 %192
        %v194 = vsub.f32 %v187, %v193
        %v195 = vsub.f32 %v188, %v193
        %v196 = vmul.f32 %v194, 1.442695
        %v197 = vpow.pop %v196
        %v198 = vmul.f32 %v195, 1.442695
        %v199 = vpow.pop %v198
        %v200 = vsel %vm189, %v199, 0.0
        %v201 = vadd.f32 %v197, %v200
        %202 = vadd.xlane.f32.xlu0 %v201
        %v203 = vpop.xlane.xlu0 %202
        %v204 = vlog2.pop %v203
        %v205 = vmul.f32 %v204, 0.6931472
        %v206 = vlaneseq
        %v207 = vand.u32 %v206, 127
        %v208 = vadd.s32 %v207, 128
        %209 = vset.pattern.permute.xlu0 0
        %210 = vperm.xlu0 %209, %v178
        %v211 = vpop.permute.xlu0 %210
        %vm212 = vcmp.eq.s32.totalorder %v207, %v211
        %vm213 = vcmp.eq.s32.totalorder %v208, %v211
        %v214 = vsel %vm212, 0.9, 0.0006289308
        %v215 = vsel %vm213, 0.9, 0.0006289308
        %v216 = vmul.f32 %v214, %v187
        %v217 = vmul.f32 %v215, %v188
        %v218 = vsel %vm189, %v217, 0.0
        %v219 = vadd.f32 %v216, %v218
        %220 = vadd.xlane.f32.xlu0 %v219
        %v221 = vpop.xlane.xlu0 %220
        %v222 = vadd.f32 %v193, %v205
        %v223 = vsub.f32 %v222, %v221
        %v224 = vsel %vm184, %v223, 0.0
        %vm225 = vcmask 7168
        %v226 = vsel %vm225, %v224, 0.0
        %227 = vadd.xlane.f32.xlu0 %v226
        %v228 = vpop.xlane.xlu0 %227
        %v229 = vrot.slane %v228, 4
        %v230 = vadd.f32 %v228, %v229
        %v231 = vrot.slane %v230, 2
        %v232 = vadd.f32 %v230, %v231
        %v233 = vrot.slane %v232, 1
        %v234 = vadd.f32 %v232, %v233
        %s235 = vtos %v234
        %v236 = vstv %s235
        %237 = vst [vmem:[%s171] sm:$0x1] %v236
        %s238 = sand.u32 %s79, 1
        %s239 = scalar_lea.sflag [#allocation4], %s238
        %s240 = sand.u32 %s79, 1
        %s241 = scalar_lea.vmem [#allocation5], %s240
        // Predicated region
        $region33: #{tpu_custom_call.1} parent=27 // pred_check
          %p242 = pneg %p89
        $region34: #{tpu_custom_call.1} parent=27 // pred_check_branch
          %244 = sbr.rel (%p242) target = $region36
        $region35: #{tpu_custom_call.1} parent=27 // pred_region
          %s246 = ssub.s32 16, 16
          %247 = vsyncadd %s239, %s246
          %s248 = smul.addr %s19, 16
          %s249 = scalar_lea.hbm %s2, %s248
          %s251 = sshll.u32 %s241, 4
          %s252 = int_to_ptr.vmem [resolvable:$true] %s251
          %254 = dma.vmem_to_hbm [thread:$0]  %s252, 16, %s249, %s239
        $region36: #{tpu_custom_call.1} parent=27 // pred_fallthru
          _
      $region28: #{tpu_custom_call.1} parent=5 // pred_fallthru
        _
      %p255 = scmp.le.s32.totalorder 2, %s14
      // Predicated region
      $region37: #{tpu_custom_call.1} parent=5 // pred_check
        %p256 = pneg %p255
      $region38: #{tpu_custom_call.1} parent=5 // pred_check_branch
        %258 = sbr.rel (%p256) target = $region40
      $region39: #{tpu_custom_call.1} parent=5 // pred_region
        %s259 = ssub.s32 %s14, 2
        // Predicated region
        $region41: #{tpu_custom_call.1} parent=39 // pred_check
          %p260 = pneg %p95
        $region42: #{tpu_custom_call.1} parent=39 // pred_check_branch
          %262 = sbr.rel (%p260) target = $region44
        $region43: #{tpu_custom_call.1} parent=39 // pred_region
          %s263 = sand.u32 %s80, 1
          %s264 = scalar_lea.sflag [#allocation4], %s263
          %s265 = sand.u32 %s80, 1
          %s266 = scalar_lea.vmem [#allocation5], %s265
          %267 = dma.done %s264, 16
        $region44: #{tpu_custom_call.1} parent=39 // pred_fallthru
          _
      $region40: #{tpu_custom_call.1} parent=5 // pred_fallthru
        _
    $region6: #{tpu_custom_call.1} parent=1 // loop_footer
      %s18 = sadd.s32 1, %s14
    $region7: #{tpu_custom_call.1} parent=1 // loop_footer_branch
      %13 = sbr.rel target = $region3
    $region8: #{tpu_custom_call.1} parent=1 // loop_exit
      _
    %268 = vsyncpa [#allocation3], 1
    %s269 = scalar_lea.sflag [#allocation3], 1
    %270 = vsyncpa %s269, 1
    %271 = vsyncpa [#allocation4], 1
    %s272 = scalar_lea.sflag [#allocation4], 1
    %273 = vsyncpa %s272, 1

</llo_original>
